<compile_context>
chip_gen: v6e
topology: v6e:2x2x1
jax: 0.10.0
libtpu: 0.0.40
codegen_flags: <defaults>
</compile_context>

<pallas_src>
import functools
import math

import jax
import jax.numpy as jnp
from jax.experimental import pallas as pl
from jax.experimental.pallas import tpu as pltpu


def _round_up(a, b):
    return (a + b - 1) // b * b


def _vmem_limit(nbytes):
    # Generous headroom, but stay under v7x's 64 MiB physical VMEM per core.
    return int(min(max(2 * nbytes, 32 * 1024 * 1024), 48 * 1024 * 1024))


# ---------------------------------------------------------------------------
# Kernel A: z = x @ W' + b'  (bn1/bn2 already folded into W', b'),
#           then emb = z / max(||z||, 1e-12).   Grid: (num_K_tiles,)
# ---------------------------------------------------------------------------
def _fc1_normalize_kernel(x_ref, w_ref, b_ref, emb_ref, acc_ref):
    k = pl.program_id(0)

    @pl.when(k == 0)
    def _init():
        acc_ref[...] = jnp.zeros_like(acc_ref)

    # Streamed K-tile matmul on the MXU, fp32 accumulation in VMEM scratch.
    acc_ref[...] += jnp.dot(x_ref[...], w_ref[...],
                            preferred_element_type=jnp.float32)

    @pl.when(k == pl.num_programs(0) - 1)
    def _finalize():
        z = acc_ref[...] + b_ref[...]
        # F.normalize(dim=1): rsqrt issues on the EUP slot (no VPU divide).
        inv = jax.lax.rsqrt(
            jnp.maximum(jnp.sum(z * z, axis=-1, keepdims=True), 1e-24))
        emb_ref[...] = (z * inv).astype(emb_ref.dtype)


# ---------------------------------------------------------------------------
# Kernel B: ArcFace margin for one tile of classes.   Grid: (num_class_tiles,)
# ---------------------------------------------------------------------------
def _arcface_kernel(emb_ref, wn_ref, labels_ref, out_ref,
                    *, s, cos_m, sin_m, th, mm, tj):
    j = pl.program_id(0)
    # Arc weight is pre-normalized and pre-transposed -> (channel, class_tile).
    cos_th = jnp.dot(emb_ref[...], wn_ref[...],
                     preferred_element_type=jnp.float32)
    cos_th = jnp.clip(cos_th, -1.0, 1.0)
    sin_th = jnp.sqrt(1.0 - cos_th * cos_th)
    # torch.where + the masked overwrite collapse to one select on cos_th > th.
    cos_th_m = jnp.where(cos_th > th,
                         cos_th * cos_m - sin_th * sin_m,
                         cos_th - mm)
    # One-hot scatter for this class tile (global class index = lane + j*tj).
    cls = jax.lax.broadcasted_iota(jnp.int32, cos_th.shape, 1) + j * tj
    onehot = (cls == labels_ref[...]).astype(jnp.float32)
    out_ref[...] = (cos_th + onehot * (cos_th_m - cos_th)) * s


# ---------------------------------------------------------------------------
# Wrapper: parameter folding, padding, tiling, pallas_call plumbing.
# ---------------------------------------------------------------------------
def shopee_densenet_forward(x_nchw, labels, params, *, s=10.0, m=0.5,
                            tk=None, tj=None, matmul_dtype=jnp.bfloat16):
    """x_nchw: (B, C, H, W) backbone feature map; labels: (B,) int."""
    B, C, H, W = x_nchw.shape
    K = C * H * W
    eps = 1e-5

    fc1_w = params["fc1_w"].astype(jnp.float32)        # (CH, K)
    fc1_b = params["fc1_b"].astype(jnp.float32)        # (CH,)
    arc_w = params["arc_w"].astype(jnp.float32)        # (OUT, CH)
    CH = fc1_w.shape[0]
    OUT = arc_w.shape[0]

    # ---- parameter glue (plain JAX, once per call) --------------------------
    # Fold bn1 (per flattened NCHW element) and bn2 (per fc1 output feature)
    # into the fc1 weight/bias:  z = x @ W' + b'.
    sc1 = params["bn1_gamma"] / jnp.sqrt(params["bn1_var"] + eps)     # (C,)
    bs1 = params["bn1_beta"] - params["bn1_mean"] * sc1               # (C,)
    scale1 = jnp.repeat(sc1, H * W)                                    # (K,)
    bias1 = jnp.repeat(bs1, H * W)                                     # (K,)
    sc2 = params["bn2_gamma"] / jnp.sqrt(params["bn2_var"] + eps)     # (CH,)
    bs2 = params["bn2_beta"] - params["bn2_mean"] * sc2               # (CH,)
    w_fold = (fc1_w * scale1[None, :]).T * sc2[None, :]                # (K, CH)
    b_fold = (fc1_w @ bias1 + fc1_b) * sc2 + bs2                       # (CH,)

    # Pre-normalize ArcFace weight rows (F.normalize(weight, dim=1)), then
    # pre-transpose so the in-kernel matmul is (B, CH) @ (CH, class_tile).
    wn_t = (arc_w / jnp.maximum(
        jnp.linalg.norm(arc_w, axis=1, keepdims=True), 1e-12)).T       # (CH, OUT)

    # ---- padding / tile selection -------------------------------------------
    item = jnp.dtype(matmul_dtype).itemsize
    sub = 8 if item == 4 else 16
    B_pad = _round_up(max(B, sub), sub)
    CH_pad = _round_up(CH, 128)

    if tk is None:
        # Keep each double-buffered fc1 weight block well under scoped VMEM
        # on every generation (v7x: 64 MiB physical, 32 MiB default scoped).
        tk = max(128, min(8192, (8 * 1024 * 1024) // (CH_pad * item)))
    tk = max(128, (tk // 128) * 128)
    tk = min(tk, _round_up(K, 128))
    K_pad = _round_up(K, tk)
    nk = K_pad // tk

    if tj is None:
        tj = 512
    tj = max(128, (tj // 128) * 128)
    OUT_pad = _round_up(OUT, tj)
    if OUT_pad // tj == 1:                 # single tile: shrink to the minimum
        tj = _round_up(OUT, 128)
        OUT_pad = tj
    nj = OUT_pad // tj

    x_p = jnp.zeros((B_pad, K_pad), matmul_dtype)
    x_p = x_p.at[:B, :K].set(x_nchw.reshape(B, K).astype(matmul_dtype))
    w_p = jnp.zeros((K_pad, CH_pad), matmul_dtype)
    w_p = w_p.at[:K, :CH].set(w_fold.astype(matmul_dtype))
    b_p = jnp.zeros((1, CH_pad), jnp.float32).at[:, :CH].set(b_fold[None, :])
    wn_p = jnp.zeros((CH_pad, OUT_pad), matmul_dtype)
    wn_p = wn_p.at[:CH, :OUT].set(wn_t.astype(matmul_dtype))
    labels_p = jnp.full((B_pad, 1), -1, jnp.int32)
    labels_p = labels_p.at[:B, 0].set(labels.astype(jnp.int32))

    # ---- kernel A: fc1 (+ folded BNs) + L2 normalize -------------------------
    vmem_a = (2 * (B_pad * tk + tk * CH_pad) * item
              + CH_pad * 4 + B_pad * CH_pad * (4 + item))
    emb = pl.pallas_call(
        _fc1_normalize_kernel,
        out_shape=jax.ShapeDtypeStruct((B_pad, CH_pad), matmul_dtype),
        grid_spec=pltpu.PrefetchScalarGridSpec(
            num_scalar_prefetch=0,
            grid=(nk,),
            in_specs=[
                pl.BlockSpec((B_pad, tk), lambda k: (0, k)),      # x tile
                pl.BlockSpec((tk, CH_pad), lambda k: (k, 0)),     # fc1 weight tile
                pl.BlockSpec((1, CH_pad), lambda k: (0, 0)),      # folded bias
            ],
            out_specs=pl.BlockSpec((B_pad, CH_pad), lambda k: (0, 0)),
            scratch_shapes=[pltpu.VMEM((B_pad, CH_pad), jnp.float32)],
        ),
        compiler_params=pltpu.CompilerParams(
            dimension_semantics=("arbitrary",),       # K is a reduction axis
            vmem_limit_bytes=_vmem_limit(vmem_a),
        ),
        cost_estimate=pl.CostEstimate(
            flops=2 * B_pad * K_pad * CH_pad,
            transcendentals=B_pad,
            bytes_accessed=(B_pad * K_pad + K_pad * CH_pad) * item
            + CH_pad * 4 + B_pad * CH_pad * item,
        ),
    )(x_p, w_p, b_p)

    # ---- kernel B: ArcFace margin, class-tiled, lane-dense output ------------
    arc_kernel = functools.partial(
        _arcface_kernel,
        s=float(s),
        cos_m=float(math.cos(m)),
        sin_m=float(math.sin(m)),
        th=float(math.cos(math.pi - m)),
        mm=float(math.sin(math.pi - m) * m),
        tj=tj,
    )
    vmem_b = (B_pad * CH_pad * item
              + 2 * (CH_pad * tj * item + B_pad * tj * 4) + B_pad * 4)
    out_full = pl.pallas_call(
        arc_kernel,
        out_shape=jax.ShapeDtypeStruct((B_pad, OUT_pad), jnp.float32),
        grid_spec=pltpu.PrefetchScalarGridSpec(
            num_scalar_prefetch=0,
            grid=(nj,),
            in_specs=[
                pl.BlockSpec((B_pad, CH_pad), lambda j: (0, 0)),  # embedding
                pl.BlockSpec((CH_pad, tj), lambda j: (0, j)),     # arc weight tile
                pl.BlockSpec((B_pad, 1), lambda j: (0, 0)),       # labels
            ],
            out_specs=pl.BlockSpec((B_pad, tj), lambda j: (0, j)),
        ),
        compiler_params=pltpu.CompilerParams(
            dimension_semantics=("parallel",),        # class tiles independent
            vmem_limit_bytes=_vmem_limit(vmem_b),
        ),
        cost_estimate=pl.CostEstimate(
            flops=2 * B_pad * CH_pad * OUT_pad,
            transcendentals=B_pad * OUT_pad,
            bytes_accessed=B_pad * CH_pad * item + CH_pad * OUT_pad * item
            + B_pad * OUT_pad * 4,
        ),
    )(emb, wn_p, labels_p)

    return out_full[:B, :OUT]


# ---------------------------------------------------------------------------
# Pure-JAX fp32 reference mirroring the PyTorch forward (eval mode).
# ---------------------------------------------------------------------------
def reference_forward(x_nchw, labels, params, *, s=10.0, m=0.5):
    B = x_nchw.shape[0]
    eps = 1e-5
    f = (x_nchw - params["bn1_mean"][None, :, None, None]) / jnp.sqrt(
        params["bn1_var"][None, :, None, None] + eps)
    f = (f * params["bn1_gamma"][None, :, None, None]
         + params["bn1_beta"][None, :, None, None])
    f = f.reshape(B, -1)
    f = f @ params["fc1_w"].T + params["fc1_b"]
    f = (f - params["bn2_mean"]) / jnp.sqrt(params["bn2_var"] + eps)
    f = f * params["bn2_gamma"] + params["bn2_beta"]
    f = f / jnp.maximum(jnp.linalg.norm(f, axis=1, keepdims=True), 1e-12)
    w = params["arc_w"]
    wn = w / jnp.maximum(jnp.linalg.norm(w, axis=1, keepdims=True), 1e-12)
    cos_th = jnp.clip(f @ wn.T, -1.0, 1.0)
    sin_th = jnp.sqrt(1.0 - cos_th ** 2)
    cos_m, sin_m = math.cos(m), math.sin(m)
    th, mm = math.cos(math.pi - m), math.sin(math.pi - m) * m
    cos_th_m = jnp.where(cos_th > th, cos_th * cos_m - sin_th * sin_m,
                         cos_th - mm)
    onehot = jax.nn.one_hot(labels, w.shape[0], dtype=jnp.float32)
    return (onehot * cos_th_m + (1.0 - onehot) * cos_th) * s


if __name__ == "__main__":
    # Small shapes consistent with the module head: in_features = 4 stands in
    # for densenet121's 1024, spatial 16x16 is fixed by the fc1 definition,
    # channel_size = 32, out_feature = 200 classes, batch = 2.
    B, C, H, W = 2, 4, 16, 16
    channel_size, out_feature = 32, 200
    K = C * H * W

    key = jax.random.PRNGKey(0)
    (kx, klab, kfc, kfb, karc,
     kg1, kb1, km1, kv1, kg2, kb2, km2, kv2) = jax.random.split(key, 13)

    x = jax.random.normal(kx, (B, C, H, W), dtype=jnp.float32)
    labels = jax.random.randint(klab, (B,), 0, out_feature, dtype=jnp.int32)

    params = {
        # BatchNorm2d(in_features) with non-trivial affine / running stats
        "bn1_gamma": 1.0 + 0.1 * jax.random.normal(kg1, (C,), jnp.float32),
        "bn1_beta": 0.1 * jax.random.normal(kb1, (C,), jnp.float32),
        "bn1_mean": 0.1 * jax.random.normal(km1, (C,), jnp.float32),
        "bn1_var": jax.random.uniform(kv1, (C,), jnp.float32, 0.5, 1.5),
        # Linear(in_features*16*16, channel_size)
        "fc1_w": jax.random.normal(kfc, (channel_size, K), jnp.float32)
        / math.sqrt(K),
        "fc1_b": 0.01 * jax.random.normal(kfb, (channel_size,), jnp.float32),
        # BatchNorm1d(channel_size)
        "bn2_gamma": 1.0 + 0.1 * jax.random.normal(kg2, (channel_size,), jnp.float32),
        "bn2_beta": 0.1 * jax.random.normal(kb2, (channel_size,), jnp.float32),
        "bn2_mean": 0.1 * jax.random.normal(km2, (channel_size,), jnp.float32),
        "bn2_var": jax.random.uniform(kv2, (channel_size,), jnp.float32, 0.5, 1.5),
        # ArcModule weight (out_feature, channel_size), xavier_normal
        "arc_w": jax.random.normal(karc, (out_feature, channel_size), jnp.float32)
        * math.sqrt(2.0 / (out_feature + channel_size)),
    }

    # bf16 MXU path (production config).  tk=512 / tj=128 exercise both the
    # K-reduction grid (nk=2) and the class-tile grid (nj=2) at demo shapes.
    out = shopee_densenet_forward(x, labels, params, s=10.0, m=0.5,
                                  tk=512, tj=128)
    out = jax.block_until_ready(out)

    # fp32 matmul path for a tight semantic check against the reference.
    out_f32 = shopee_densenet_forward(x, labels, params, s=10.0, m=0.5,
                                      tk=512, tj=128,
                                      matmul_dtype=jnp.float32)
    out_f32 = jax.block_until_ready(out_f32)

    ref = reference_forward(x, labels, params, s=10.0, m=0.5)
    assert out.shape == (B, out_feature)
    assert jnp.allclose(out_f32, ref, atol=1e-3, rtol=1e-3), \
        float(jnp.max(jnp.abs(out_f32 - ref)))
    # bf16 matmul inputs (fp32 accumulation) -> looser tolerance.
    assert jnp.allclose(out, ref, atol=5e-2, rtol=5e-2), \
        float(jnp.max(jnp.abs(out - ref)))

    print("KERNEL_OK")
</pallas_src>

<mosaic_0001>
module attributes {stable_mosaic.version = 11 : i64} {
  func.func @_fc1_normalize_kernel(%arg0: i32, %arg1: memref<16x512xbf16, #tpu.memory_space<vmem>>, %arg2: memref<512x128xbf16, #tpu.memory_space<vmem>>, %arg3: memref<1x128xf32, #tpu.memory_space<vmem>>, %arg4: memref<16x128xbf16, #tpu.memory_space<vmem>>, %arg5: memref<16x128xf32, #tpu.memory_space<vmem>>) attributes {dimension_semantics = [#tpu.dimension_semantics<arbitrary>], iteration_bounds = array<i64: 2>, scalar_prefetch = 0 : i64, scratch_operands = 1 : i64, tpu.core_type = #tpu.core_type<tc>, window_params = [{transform_indices = @transform_0, window_bounds = array<i64: 16, 512>}, {transform_indices = @transform_1, window_bounds = array<i64: 512, 128>}, {pipeline_mode = #tpu.pipeline_mode<synchronous>, transform_indices = @transform_2, window_bounds = array<i64: 1, 128>}, {pipeline_mode = #tpu.pipeline_mode<synchronous>, transform_indices = @transform_3, window_bounds = array<i64: 16, 128>}]} {
    %c0_i32 = arith.constant 0 : i32
    %0 = arith.cmpi eq, %arg0, %c0_i32 : i32
    %1 = arith.extui %0 : i1 to i32
    %c0_i32_0 = arith.constant 0 : i32
    %2 = arith.cmpi ne, %1, %c0_i32_0 : i32
    scf.if %2 {
      %cst_9 = arith.constant 0.000000e+00 : f32
      %12 = vector.broadcast %cst_9 : f32 to vector<16x128xf32>
      %c0_10 = arith.constant 0 : index
      %c0_11 = arith.constant 0 : index
      %13 = vector.load %arg5[%c0_10, %c0_11] : memref<16x128xf32, #tpu.memory_space<vmem>>, vector<16x128xf32>
      tpu.vector_store %arg5[%c0_10, %c0_11], %12 {strides = array<i32>} : memref<16x128xf32, #tpu.memory_space<vmem>>, vector<16x128xf32>,
    } else {
    }
    %c0 = arith.constant 0 : index
    %c0_1 = arith.constant 0 : index
    %3 = vector.load %arg5[%c0, %c0_1] : memref<16x128xf32, #tpu.memory_space<vmem>>, vector<16x128xf32>
    %c0_2 = arith.constant 0 : index
    %c0_3 = arith.constant 0 : index
    %4 = vector.load %arg1[%c0_2, %c0_3] : memref<16x512xbf16, #tpu.memory_space<vmem>>, vector<16x512xbf16>
    %c0_4 = arith.constant 0 : index
    %c0_5 = arith.constant 0 : index
    %5 = vector.load %arg2[%c0_4, %c0_5] : memref<512x128xbf16, #tpu.memory_space<vmem>>, vector<512x128xbf16>
    %cst = arith.constant dense<0.000000e+00> : vector<16x128xf32>
    %6 = tpu.matmul %4, %5, %cst {dimension_numbers = #tpu.dot_dimension_numbers<[1], [0], [0], [1], [0, 0, 1, 1], [], []>} : vector<16x512xbf16>, vector<512x128xbf16>, vector<16x128xf32> -> vector<16x128xf32>
    %7 = arith.addf %3, %6 : vector<16x128xf32>
    %c0_6 = arith.constant 0 : index
    %c0_7 = arith.constant 0 : index
    %8 = vector.load %arg5[%c0_6, %c0_7] : memref<16x128xf32, #tpu.memory_space<vmem>>, vector<16x128xf32>
    tpu.vector_store %arg5[%c0_6, %c0_7], %7 {strides = array<i32>} : memref<16x128xf32, #tpu.memory_space<vmem>>, vector<16x128xf32>,
    %c1_i32 = arith.constant 1 : i32
    %9 = arith.cmpi eq, %arg0, %c1_i32 : i32
    %10 = arith.extui %9 : i1 to i32
    %c0_i32_8 = arith.constant 0 : i32
    %11 = arith.cmpi ne, %10, %c0_i32_8 : i32
    scf.if %11 {
      %c0_9 = arith.constant 0 : index
      %c0_10 = arith.constant 0 : index
      %12 = vector.load %arg5[%c0_9, %c0_10] : memref<16x128xf32, #tpu.memory_space<vmem>>, vector<16x128xf32>
      %c0_11 = arith.constant 0 : index
      %c0_12 = arith.constant 0 : index
      %13 = vector.load %arg3[%c0_11, %c0_12] : memref<1x128xf32, #tpu.memory_space<vmem>>, vector<1x128xf32>
      %14 = vector.broadcast %13 : vector<1x128xf32> to vector<16x128xf32>
      %15 = arith.addf %12, %14 : vector<16x128xf32>
      %16 = arith.mulf %15, %15 : vector<16x128xf32>
      %cst_13 = arith.constant dense<0.000000e+00> : vector<16xf32>
      %17 = vector.multi_reduction <add>, %16, %cst_13 [1] : vector<16x128xf32> to vector<16xf32>
      %18 = vector.shape_cast %17 : vector<16xf32> to vector<16x1xf32>
      %cst_14 = arith.constant 1.000000e-24 : f32
      %19 = vector.broadcast %cst_14 : f32 to vector<16x1xf32>
      %20 = arith.maximumf %18, %19 : vector<16x1xf32>
      %21 = math.rsqrt %20 : vector<16x1xf32>
      %22 = vector.broadcast %21 : vector<16x1xf32> to vector<16x128xf32>
      %23 = arith.mulf %15, %22 : vector<16x128xf32>
      %24 = arith.truncf %23 : vector<16x128xf32> to vector<16x128xbf16>
      %c0_15 = arith.constant 0 : index
      %c0_16 = arith.constant 0 : index
      %25 = vector.load %arg4[%c0_15, %c0_16] : memref<16x128xbf16, #tpu.memory_space<vmem>>, vector<16x128xbf16>
      tpu.vector_store %arg4[%c0_15, %c0_16], %24 {strides = array<i32>} : memref<16x128xbf16, #tpu.memory_space<vmem>>, vector<16x128xbf16>,
    } else {
    }
    return
  }
  func.func @transform_0(%arg0: i32) -> (i32, i32) {
    %c0_i32 = arith.constant 0 : i32
    %c0_i32_0 = arith.constant 0 : i32
    return %c0_i32, %arg0 : i32, i32
  }
  func.func @transform_1(%arg0: i32) -> (i32, i32) {
    %c0_i32 = arith.constant 0 : i32
    %c0_i32_0 = arith.constant 0 : i32
    return %arg0, %c0_i32 : i32, i32
  }
  func.func @transform_2(%arg0: i32) -> (i32, i32) {
    %c0_i32 = arith.constant 0 : i32
    %c0_i32_0 = arith.constant 0 : i32
    %c0_i32_1 = arith.constant 0 : i32
    return %c0_i32, %c0_i32_0 : i32, i32
  }
  func.func @transform_3(%arg0: i32) -> (i32, i32) {
    %c0_i32 = arith.constant 0 : i32
    %c0_i32_0 = arith.constant 0 : i32
    %c0_i32_1 = arith.constant 0 : i32
    return %c0_i32, %c0_i32_0 : i32, i32
  }
}

</mosaic_0001>

<llo_original>
// kernel: tpu_custom_call.1
$region0: #{tpu_custom_call.1}
  #allocation0 [shape = 'u32[]', space=smem, size = 0x4, offset = 0x4, fixed_abs, tag = 'smem constant byte address 0x4 - core index']
  #allocation1 [shape = 'u32[144,128]{1,0:T(1,128)}', space=vmem, size = 0x12000, scoped, tag = 'internal scratch']
  #allocation2 [shape = 'f32[16,128]{1,0:T(8,128)}', space=vmem, size = 0x2000, scoped, tag = 'scratch operand']
  %s0 = inlined_call_operand.hbm [shape: bf16[16,1024], index: 0, kind: input, shape index: {}]
  %s1 = inlined_call_operand.hbm [shape: bf16[1024,128], index: 1, kind: input, shape index: {}]
  %s2 = inlined_call_operand.vmem [shape: f32[1,128], index: 2, kind: input, shape index: {}]
  %s3 = inlined_call_operand.hbm [shape: bf16[16,128], index: 3, kind: output, shape index: {}]
  %s4 = sld [smem:[#allocation0]]
  $region61: #{tpu_custom_call.1} parent=0
    _
  %s6 = ssub.s32 1, %s4
  %s7 = scalar_select 0, %s6, %s4
  $region1: #{tpu_custom_call.1} parent=0
    #allocation3 [shape = 'u8[32768]{0}', space=vmem, size = 0x8000, scoped, tag = 'input window, operand 0']
    #allocation4 [shape = 's32[2]{0}', space=sflag, size = 0x8, scoped, tag = 'scoped memory for tpu_custom_call.1']
    #allocation5 [shape = 's32[2]{0}', space=sflag, size = 0x8, scoped, tag = 'scoped memory for tpu_custom_call.1']
    #allocation6 [shape = 'u8[262144]{0}', space=vmem, size = 0x40000, scoped, tag = 'input window, operand 1']
    #allocation7 [shape = 's32[2]{0}', space=sflag, size = 0x8, scoped, tag = 'scoped memory for tpu_custom_call.1']
    #allocation8 [shape = 'u8[4096]{0}', space=vmem, size = 0x1000, scoped, tag = 'output window, operand 0, single buffered']
    %8 = vsyncpa [#allocation4], 0
    %s9 = scalar_lea.sflag [#allocation4], 1
    %10 = vsyncpa %s9, 0
    %11 = vsyncpa [#allocation7], 0
    %s12 = scalar_lea.sflag [#allocation7], 1
    %13 = vsyncpa %s12, 0
    %14 = vsyncpa [#allocation5], 0
    loop: start=0, step=1, limit=4
    $region2: #{tpu_custom_call.1} parent=1 // loop_pre_header
      _
    $region3: #{tpu_custom_call.1} parent=1 // loop_header
      %s16 = sphi 0, %s20
      %p17 = scmp.ge.s32.totalorder %s16, 4
      %s26 = sphi 0, %s28
      %s29 = sphi 0, %s26
      %s30 = sphi 0, %s29
      %s46 = sphi 0, %s30
      %s52 = sphi 0, %s54
      %s55 = sphi 0, %s52
      %s56 = sphi 0, %s55
      %s72 = sphi 0, %s56
      %s76 = sphi 0, %s76
      %s78 = sphi 0, %s76
      %s79 = sphi 0, %s78
      %s93 = sphi 0, %s79
      %s97 = sphi 0, %s97
      %s99 = sphi 0, %s97
      %s100 = sphi 0, %s99
      %s114 = sphi 0, %s100
    $region4: #{tpu_custom_call.1} parent=1 // loop_header_branch
      %19 = sbr.rel (%p17) target = $region8
    $region5: #{tpu_custom_call.1} parent=1 // loop_body
      %s21 = ssub.s32 %s16, 1
      %s22 = ssub.s32 %s16, 2
      %s23 = sadd.s32 %s16, 1
      %s24 = ssub.s32 %s16, %s23
      %p25 = scmp.eq.s32.totalorder %s24, 0
      %s27 = sadd.s32 %s26, 1
      %s28 = scalar_select %p25, %s26, %s27
      %p31 = pneg %p25
      %p32 = scmp.eq.s32.totalorder %s16, 1
      %p33 = por %p31, %p32
      %p34 = scmp.ne.s32.totalorder %s26, %s29
      %p35 = scmp.eq.s32.totalorder %s16, 0
      %p36 = por %p34, %p35
      %p37 = scmp.ne.s32.totalorder %s26, %s29
      %p38 = scmp.eq.s32.totalorder %s21, 1
      %p39 = por %p37, %p38
      %p40 = scmp.ne.s32.totalorder %s29, %s30
      %p41 = scmp.eq.s32.totalorder %s21, 0
      %p42 = por %p40, %p41
      %p43 = scmp.ne.s32.totalorder %s29, %s30
      %p44 = scmp.eq.s32.totalorder %s22, 1
      %p45 = por %p43, %p44
      %p47 = scmp.ne.s32.totalorder %s30, %s46
      %p48 = scmp.eq.s32.totalorder %s22, 0
      %p49 = por %p47, %p48
      %s50 = ssub.s32 %s16, %s23
      %p51 = scmp.eq.s32.totalorder %s50, 0
      %s53 = sadd.s32 %s52, 1
      %s54 = scalar_select %p51, %s52, %s53
      %p57 = pneg %p51
      %p58 = scmp.eq.s32.totalorder %s16, 1
      %p59 = por %p57, %p58
      %p60 = scmp.ne.s32.totalorder %s52, %s55
      %p61 = scmp.eq.s32.totalorder %s16, 0
      %p62 = por %p60, %p61
      %p63 = scmp.ne.s32.totalorder %s52, %s55
      %p64 = scmp.eq.s32.totalorder %s21, 1
      %p65 = por %p63, %p64
      %p66 = scmp.ne.s32.totalorder %s55, %s56
      %p67 = scmp.eq.s32.totalorder %s21, 0
      %p68 = por %p66, %p67
      %p69 = scmp.ne.s32.totalorder %s55, %s56
      %p70 = scmp.eq.s32.totalorder %s22, 1
      %p71 = por %p69, %p70
      %p73 = scmp.ne.s32.totalorder %s56, %s72
      %p74 = scmp.eq.s32.totalorder %s22, 0
      %p75 = por %p73, %p74
      %s77 = sadd.s32 %s76, 1
      %p80 = scmp.eq.s32.totalorder %s16, 1
      %p81 = scmp.ne.s32.totalorder %s76, %s78
      %p82 = scmp.eq.s32.totalorder %s16, 0
      %p83 = por %p81, %p82
      %p84 = scmp.ne.s32.totalorder %s76, %s78
      %p85 = scmp.eq.s32.totalorder %s21, 1
      %p86 = por %p84, %p85
      %p87 = scmp.ne.s32.totalorder %s78, %s79
      %p88 = scmp.eq.s32.totalorder %s21, 0
      %p89 = por %p87, %p88
      %p90 = scmp.ne.s32.totalorder %s78, %s79
      %p91 = scmp.eq.s32.totalorder %s22, 1
      %p92 = por %p90, %p91
      %p94 = scmp.ne.s32.totalorder %s79, %s93
      %p95 = scmp.eq.s32.totalorder %s22, 0
      %p96 = por %p94, %p95
      %s98 = sadd.s32 %s97, 1
      %p101 = scmp.eq.s32.totalorder %s16, 1
      %p102 = scmp.ne.s32.totalorder %s97, %s99
      %p103 = scmp.eq.s32.totalorder %s16, 0
      %p104 = por %p102, %p103
      %p105 = scmp.ne.s32.totalorder %s97, %s99
      %p106 = scmp.eq.s32.totalorder %s21, 1
      %p107 = por %p105, %p106
      %p108 = scmp.ne.s32.totalorder %s99, %s100
      %p109 = scmp.eq.s32.totalorder %s21, 0
      %p110 = por %p108, %p109
      %p111 = scmp.ne.s32.totalorder %s99, %s100
      %p112 = scmp.eq.s32.totalorder %s22, 1
      %p113 = por %p111, %p112
      %p115 = scmp.ne.s32.totalorder %s100, %s114
      %p116 = scmp.eq.s32.totalorder %s22, 0
      %p117 = por %p115, %p116
      %p118 = scmp.le.s32.totalorder 1, %s16
      %p119 = scmp.lt.s32.totalorder %s16, 3
      %p120 = pnand %p118, %p119
      %p121 = pneg %p120
      // Predicated region
      $region9: #{tpu_custom_call.1} parent=5 // pred_check
        _
      $region10: #{tpu_custom_call.1} parent=5 // pred_check_branch
        %123 = sbr.rel (%p120) target = $region12
      $region11: #{tpu_custom_call.1} parent=5 // pred_region
        %s124 = ssub.s32 %s16, 1
        // Predicated region
        $region13: #{tpu_custom_call.1} parent=11 // pred_check
          %p125 = pneg %p89
        $region14: #{tpu_custom_call.1} parent=11 // pred_check_branch
          %127 = sbr.rel (%p125) target = $region16
        $region15: #{tpu_custom_call.1} parent=11 // pred_region
          _
        $region16: #{tpu_custom_call.1} parent=11 // pred_fallthru
          _
      $region12: #{tpu_custom_call.1} parent=5 // pred_fallthru
        _
      %p128 = scmp.lt.s32.totalorder %s16, 2
      // Predicated region
      $region17: #{tpu_custom_call.1} parent=5 // pred_check
        %p129 = pneg %p128
      $region18: #{tpu_custom_call.1} parent=5 // pred_check_branch
        %131 = sbr.rel (%p129) target = $region20
      $region19: #{tpu_custom_call.1} parent=5 // pred_region
        // Predicated region
        $region21: #{tpu_custom_call.1} parent=19 // pred_check
          %p132 = pneg %p36
        $region22: #{tpu_custom_call.1} parent=19 // pred_check_branch
          %134 = sbr.rel (%p132) target = $region24
        $region23: #{tpu_custom_call.1} parent=19 // pred_region
          %s135 = sand.u32 %s26, 1
          %s136 = scalar_lea.sflag [#allocation4], %s135
          %s137 = sand.u32 %s26, 1
          %s138 = smul.addr %s137, 32
          %s139 = scalar_lea.vmem [#allocation3], %s138
          %s140 = smul.u32 4, %s16
          %s142 = ssub.s32 512, 512
          %143 = vsyncadd %s136, %s142
          %s144 = smul.addr %s140, 64
          %s145 = scalar_lea.hbm %s0, %s144
          %s146 = sshll.u32 %s139, 4
          %s147 = int_to_ptr.vmem [resolvable:$true] %s146
          %152 = dma.hbm_to_vmem [thread:$0]  %s145, 512, %s147, %s136, 512, 256, 16
        $region24: #{tpu_custom_call.1} parent=19 // pred_fallthru
          _
        // Predicated region
        $region25: #{tpu_custom_call.1} parent=19 // pred_check
          %p153 = pneg %p62
        $region26: #{tpu_custom_call.1} parent=19 // pred_check_branch
          %155 = sbr.rel (%p153) target = $region28
        $region27: #{tpu_custom_call.1} parent=19 // pred_region
          %s156 = sand.u32 %s52, 1
          %s157 = scalar_lea.sflag [#allocation7], %s156
          %s158 = sand.u32 %s52, 1
          %s159 = smul.addr %s158, 256
          %s160 = scalar_lea.vmem [#allocation6], %s159
          %s161 = smul.u32 64, %s16
          %s163 = ssub.s32 4096, 4096
          %164 = vsyncadd %s157, %s163
          %s165 = smul.addr %s161, 64
          %s166 = scalar_lea.hbm %s1, %s165
          %s167 = sshll.u32 %s160, 4
          %s168 = int_to_ptr.vmem [resolvable:$true] %s167
          %173 = dma.hbm_to_vmem [thread:$0]  %s166, 4096, %s168, %s157, 64, 64, 4
        $region28: #{tpu_custom_call.1} parent=19 // pred_fallthru
          _
      $region20: #{tpu_custom_call.1} parent=5 // pred_fallthru
        _
      %p174 = scmp.le.s32.totalorder 1, %s16
      %p175 = scmp.lt.s32.totalorder %s16, 3
      %p176 = pnand %p174, %p175
      %p177 = pneg %p176
      // Predicated region
      $region29: #{tpu_custom_call.1} parent=5 // pred_check
        _
      $region30: #{tpu_custom_call.1} parent=5 // pred_check_branch
        %179 = sbr.rel (%p176) target = $region32
      $region31: #{tpu_custom_call.1} parent=5 // pred_region
        %s180 = ssub.s32 %s16, 1
        %s181 = sand.u32 %s29, 1
        %s182 = scalar_lea.sflag [#allocation4], %s181
        %s183 = sand.u32 %s29, 1
        %s184 = smul.addr %s183, 32
        %s185 = scalar_lea.vmem [#allocation3], %s184
        // Predicated region
        $region33: #{tpu_custom_call.1} parent=31 // pred_check
          %p186 = pneg %p42
        $region34: #{tpu_custom_call.1} parent=31 // pred_check_branch
          %188 = sbr.rel (%p186) target = $region36
        $region35: #{tpu_custom_call.1} parent=31 // pred_region
          %189 = dma.done %s182, 512
        $region36: #{tpu_custom_call.1} parent=31 // pred_fallthru
          _
        %s190 = sand.u32 %s55, 1
        %s191 = scalar_lea.sflag [#allocation7], %s190
        %s192 = sand.u32 %s55, 1
        %s193 = smul.addr %s192, 256
        %s194 = scalar_lea.vmem [#allocation6], %s193
        // Predicated region
        $region37: #{tpu_custom_call.1} parent=31 // pred_check
          %p195 = pneg %p68
        $region38: #{tpu_custom_call.1} parent=31 // pred_check_branch
          %197 = sbr.rel (%p195) target = $region40
        $region39: #{tpu_custom_call.1} parent=31 // pred_region
          %198 = dma.done %s191, 4096
        $region40: #{tpu_custom_call.1} parent=31 // pred_fallthru
          _
        %s199 = sand.u32 %s29, 1
        %s200 = scalar_lea.sflag [#allocation4], %s199
        %s201 = sand.u32 %s29, 1
        %s202 = smul.addr %s201, 32
        %s203 = scalar_lea.vmem [#allocation3], %s202
        %p204 = pneg %p42
        %p205 = pneg %p39
        %s206 = sand.u32 %s55, 1
        %s207 = scalar_lea.sflag [#allocation7], %s206
        %s208 = sand.u32 %s55, 1
        %s209 = smul.addr %s208, 256
        %s210 = scalar_lea.vmem [#allocation6], %s209
        %p211 = pneg %p68
        %p212 = pneg %p65
        %p213 = pneg %p89
        %p214 = pneg %p86
        %p215 = pneg %p110
        %p216 = pneg %p107
        %s217 = smul.u32 4, %s21
        %s218 = smul.u32 64, %s21
        %p220 = scmp.eq.s32.totalorder %s21, 0
        // Predicated region
        $region41: #{tpu_custom_call.1} parent=31 // pred_check
          %p221 = pneg %p220
        $region42: #{tpu_custom_call.1} parent=31 // pred_check_branch
          %223 = sbr.rel (%p221) target = $region44
        $region43: #{tpu_custom_call.1} parent=31 // pred_region
          %224 = vst [vmem:[#allocation2] sm:$0xff] 0.0
          %225 = vst [vmem:[#allocation2 + $0x8] sm:$0xff] 0.0
        $region44: #{tpu_custom_call.1} parent=31 // pred_fallthru
          _
        %v226 = vld [vmem:[#allocation2] sm:$0xff]
        %v227 = vld [vmem:[#allocation2 + $0x8] sm:$0xff]
        %v228 = vld [vmem:[%s185] sm:$0xff]
        %v229 = vld [vmem:[%s185 + $0x8] sm:$0xff]
        %v230 = vld [vmem:[%s185 + $0x10] sm:$0xff]
        %v231 = vld [vmem:[%s185 + $0x18] sm:$0xff]
        %v232 = vld [vmem:[%s194] sm:$0xf]
        %v233 = vld [vmem:[%s194 + $0x4] sm:$0xf]
        %v234 = vld [vmem:[%s194 + $0x8] sm:$0xf]
        %v235 = vld [vmem:[%s194 + $0xc] sm:$0xf]
        %v236 = vld [vmem:[%s194 + $0x10] sm:$0xf]
        %v237 = vld [vmem:[%s194 + $0x14] sm:$0xf]
        %v238 = vld [vmem:[%s194 + $0x18] sm:$0xf]
        %v239 = vld [vmem:[%s194 + $0x1c] sm:$0xf]
        %v240 = vld [vmem:[%s194 + $0x20] sm:$0xf]
        %v241 = vld [vmem:[%s194 + $0x24] sm:$0xf]
        %v242 = vld [vmem:[%s194 + $0x28] sm:$0xf]
        %v243 = vld [vmem:[%s194 + $0x2c] sm:$0xf]
        %v244 = vld [vmem:[%s194 + $0x30] sm:$0xf]
        %v245 = vld [vmem:[%s194 + $0x34] sm:$0xf]
        %v246 = vld [vmem:[%s194 + $0x38] sm:$0xf]
        %v247 = vld [vmem:[%s194 + $0x3c] sm:$0xf]
        %v248 = vld [vmem:[%s194 + $0x40] sm:$0xf]
        %v249 = vld [vmem:[%s194 + $0x44] sm:$0xf]
        %v250 = vld [vmem:[%s194 + $0x48] sm:$0xf]
        %v251 = vld [vmem:[%s194 + $0x4c] sm:$0xf]
        %v252 = vld [vmem:[%s194 + $0x50] sm:$0xf]
        %v253 = vld [vmem:[%s194 + $0x54] sm:$0xf]
        %v254 = vld [vmem:[%s194 + $0x58] sm:$0xf]
        %v255 = vld [vmem:[%s194 + $0x5c] sm:$0xf]
        %v256 = vld [vmem:[%s194 + $0x60] sm:$0xf]
        %v257 = vld [vmem:[%s194 + $0x64] sm:$0xf]
        %v258 = vld [vmem:[%s194 + $0x68] sm:$0xf]
        %v259 = vld [vmem:[%s194 + $0x6c] sm:$0xf]
        %v260 = vld [vmem:[%s194 + $0x70] sm:$0xf]
        %v261 = vld [vmem:[%s194 + $0x74] sm:$0xf]
        %v262 = vld [vmem:[%s194 + $0x78] sm:$0xf]
        %v263 = vld [vmem:[%s194 + $0x7c] sm:$0xf]
        %v264 = vld [vmem:[%s194 + $0x80] sm:$0xf]
        %v265 = vld [vmem:[%s194 + $0x84] sm:$0xf]
        %v266 = vld [vmem:[%s194 + $0x88] sm:$0xf]
        %v267 = vld [vmem:[%s194 + $0x8c] sm:$0xf]
        %v268 = vld [vmem:[%s194 + $0x90] sm:$0xf]
        %v269 = vld [vmem:[%s194 + $0x94] sm:$0xf]
        %v270 = vld [vmem:[%s194 + $0x98] sm:$0xf]
        %v271 = vld [vmem:[%s194 + $0x9c] sm:$0xf]
        %v272 = vld [vmem:[%s194 + $0xa0] sm:$0xf]
        %v273 = vld [vmem:[%s194 + $0xa4] sm:$0xf]
        %v274 = vld [vmem:[%s194 + $0xa8] sm:$0xf]
        %v275 = vld [vmem:[%s194 + $0xac] sm:$0xf]
        %v276 = vld [vmem:[%s194 + $0xb0] sm:$0xf]
        %v277 = vld [vmem:[%s194 + $0xb4] sm:$0xf]
        %v278 = vld [vmem:[%s194 + $0xb8] sm:$0xf]
        %v279 = vld [vmem:[%s194 + $0xbc] sm:$0xf]
        %v280 = vld [vmem:[%s194 + $0xc0] sm:$0xf]
        %v281 = vld [vmem:[%s194 + $0xc4] sm:$0xf]
        %v282 = vld [vmem:[%s194 + $0xc8] sm:$0xf]
        %v283 = vld [vmem:[%s194 + $0xcc] sm:$0xf]
        %v284 = vld [vmem:[%s194 + $0xd0] sm:$0xf]
        %v285 = vld [vmem:[%s194 + $0xd4] sm:$0xf]
        %v286 = vld [vmem:[%s194 + $0xd8] sm:$0xf]
        %v287 = vld [vmem:[%s194 + $0xdc] sm:$0xf]
        %v288 = vld [vmem:[%s194 + $0xe0] sm:$0xf]
        %v289 = vld [vmem:[%s194 + $0xe4] sm:$0xf]
        %v290 = vld [vmem:[%s194 + $0xe8] sm:$0xf]
        %v291 = vld [vmem:[%s194 + $0xec] sm:$0xf]
        %v292 = vld [vmem:[%s194 + $0xf0] sm:$0xf]
        %v293 = vld [vmem:[%s194 + $0xf4] sm:$0xf]
        %v294 = vld [vmem:[%s194 + $0xf8] sm:$0xf]
        %v295 = vld [vmem:[%s194 + $0xfc] sm:$0xf]
        %v300 = vunpack.c.l.b16 %v228
        %v301 = vunpack.c.h.b16 %v228
        %v302 = vunpack.c.l.b16 %v229
        %v303 = vunpack.c.h.b16 %v229
        %v304 = vunpack.c.l.b16 %v230
        %v305 = vunpack.c.h.b16 %v230
        %v306 = vunpack.c.l.b16 %v231
        %v307 = vunpack.c.h.b16 %v231
        %v308 = vpack.c.b16 %v304, %v300
        %v309 = vpack.c.b16 %v305, %v301
        %v310 = vpack.c.b16 %v306, %v302
        %v311 = vpack.c.b16 %v307, %v303
        %v380 = vunpack.c.l.b16 %v232
        %v381 = vunpack.c.l.b16 %v233
        %v382 = vunpack.c.l.b16 %v234
        %v383 = vunpack.c.l.b16 %v235
        %v384 = vunpack.c.l.b16 %v236
        %v385 = vunpack.c.l.b16 %v237
        %v386 = vunpack.c.l.b16 %v238
        %v387 = vunpack.c.l.b16 %v239
        %v388 = vunpack.c.l.b16 %v240
        %v389 = vunpack.c.l.b16 %v241
        %v390 = vunpack.c.l.b16 %v242
        %v391 = vunpack.c.l.b16 %v243
        %v392 = vunpack.c.l.b16 %v244
        %v393 = vunpack.c.l.b16 %v245
        %v394 = vunpack.c.l.b16 %v246
        %v395 = vunpack.c.l.b16 %v247
        %v396 = vunpack.c.l.b16 %v248
        %v397 = vunpack.c.l.b16 %v249
        %v398 = vunpack.c.l.b16 %v250
        %v399 = vunpack.c.l.b16 %v251
        %v400 = vunpack.c.l.b16 %v252
        %v401 = vunpack.c.l.b16 %v253
        %v402 = vunpack.c.l.b16 %v254
        %v403 = vunpack.c.l.b16 %v255
        %v404 = vunpack.c.l.b16 %v256
        %v405 = vunpack.c.l.b16 %v257
        %v406 = vunpack.c.l.b16 %v258
        %v407 = vunpack.c.l.b16 %v259
        %v408 = vunpack.c.l.b16 %v260
        %v409 = vunpack.c.l.b16 %v261
        %v410 = vunpack.c.l.b16 %v262
        %v411 = vunpack.c.l.b16 %v263
        %v412 = vunpack.c.l.b16 %v264
        %v413 = vunpack.c.l.b16 %v265
        %v414 = vunpack.c.l.b16 %v266
        %v415 = vunpack.c.l.b16 %v267
        %v416 = vunpack.c.l.b16 %v268
        %v417 = vunpack.c.l.b16 %v269
        %v418 = vunpack.c.l.b16 %v270
        %v419 = vunpack.c.l.b16 %v271
        %v420 = vunpack.c.l.b16 %v272
        %v421 = vunpack.c.l.b16 %v273
        %v422 = vunpack.c.l.b16 %v274
        %v423 = vunpack.c.l.b16 %v275
        %v424 = vunpack.c.l.b16 %v276
        %v425 = vunpack.c.l.b16 %v277
        %v426 = vunpack.c.l.b16 %v278
        %v427 = vunpack.c.l.b16 %v279
        %v428 = vunpack.c.l.b16 %v280
        %v429 = vunpack.c.l.b16 %v281
        %v430 = vunpack.c.l.b16 %v282
        %v431 = vunpack.c.l.b16 %v283
        %v432 = vunpack.c.l.b16 %v284
        %v433 = vunpack.c.l.b16 %v285
        %v434 = vunpack.c.l.b16 %v286
        %v435 = vunpack.c.l.b16 %v287
        %v436 = vunpack.c.l.b16 %v288
        %v437 = vunpack.c.l.b16 %v289
        %v438 = vunpack.c.l.b16 %v290
        %v439 = vunpack.c.l.b16 %v291
        %v440 = vunpack.c.l.b16 %v292
        %v441 = vunpack.c.l.b16 %v293
        %v442 = vunpack.c.l.b16 %v294
        %v443 = vunpack.c.l.b16 %v295
        %v444 = vpack.c.b16 %v381, %v380
        %v445 = vpack.c.b16 %v383, %v382
        %v446 = vpack.c.b16 %v385, %v384
        %v447 = vpack.c.b16 %v387, %v386
        %v448 = vpack.c.b16 %v389, %v388
        %v449 = vpack.c.b16 %v391, %v390
        %v450 = vpack.c.b16 %v393, %v392
        %v451 = vpack.c.b16 %v395, %v394
        %v452 = vpack.c.b16 %v397, %v396
        %v453 = vpack.c.b16 %v399, %v398
        %v454 = vpack.c.b16 %v401, %v400
        %v455 = vpack.c.b16 %v403, %v402
        %v456 = vpack.c.b16 %v405, %v404
        %v457 = vpack.c.b16 %v407, %v406
        %v458 = vpack.c.b16 %v409, %v408
        %v459 = vpack.c.b16 %v411, %v410
        %v460 = vpack.c.b16 %v413, %v412
        %v461 = vpack.c.b16 %v415, %v414
        %v462 = vpack.c.b16 %v417, %v416
        %v463 = vpack.c.b16 %v419, %v418
        %v464 = vpack.c.b16 %v421, %v420
        %v465 = vpack.c.b16 %v423, %v422
        %v466 = vpack.c.b16 %v425, %v424
        %v467 = vpack.c.b16 %v427, %v426
        %v468 = vpack.c.b16 %v429, %v428
        %v469 = vpack.c.b16 %v431, %v430
        %v470 = vpack.c.b16 %v433, %v432
        %v471 = vpack.c.b16 %v435, %v434
        %v472 = vpack.c.b16 %v437, %v436
        %v473 = vpack.c.b16 %v439, %v438
        %v474 = vpack.c.b16 %v441, %v440
        %v475 = vpack.c.b16 %v443, %v442
        %508 = vmatprep.subr.bf16.mxu0 0
        %509 = vmatpush1.bf16.msra.mxu0 %v451
        %510 = vmatprep.subr.bf16.mxu0 0
        %511 = vmatpush1.bf16.msra.mxu0 %v450
        %512 = vmatprep.subr.bf16.mxu0 0
        %513 = vmatpush1.bf16.msra.mxu0 %v449
        %514 = vmatprep.subr.bf16.mxu0 0
        %515 = vmatpush1.bf16.msra.mxu0 %v448
        %516 = vmatprep.subr.bf16.mxu0 0
        %517 = vmatpush1.bf16.msra.mxu0 %v447
        %518 = vmatprep.subr.bf16.mxu0 0
        %519 = vmatpush1.bf16.msra.mxu0 %v446
        %520 = vmatprep.subr.bf16.mxu0 0
        %521 = vmatpush1.bf16.msra.mxu0 %v445
        %522 = vmatprep.subr.bf16.mxu0 0
        %523 = vmatpush1.bf16.msra.mxu0 %v444
        %524 = vmatprep.subr.bf16.mxu0 0
        %525 = vmatpush2.bf16.msra.mxu0 %v459
        %526 = vmatprep.subr.bf16.mxu0 0
        %527 = vmatpush2.bf16.msra.mxu0 %v458
        %528 = vmatprep.subr.bf16.mxu0 0
        %529 = vmatpush2.bf16.msra.mxu0 %v457
        %530 = vmatprep.subr.bf16.mxu0 0
        %531 = vmatpush2.bf16.msra.mxu0 %v456
        %532 = vmatprep.subr.bf16.mxu0 0
        %533 = vmatpush2.bf16.msra.mxu0 %v455
        %534 = vmatprep.subr.bf16.mxu0 0
        %535 = vmatpush2.bf16.msra.mxu0 %v454
        %536 = vmatprep.subr.bf16.mxu0 0
        %537 = vmatpush2.bf16.msra.mxu0 %v453
        %538 = vmatprep.subr.bf16.mxu0 0
        %539 = vmatpush2.bf16.msra.mxu0 %v452
        %540 = vmatprep.mubr.bf16.mxu0 %v309
        %541 = vmatmul.mubr.bf16.gmra.mxu0 %v308
        %v542 = vpop.f32.mrf.mxu0
        %v543 = vadd.f32 0.0, %v542
        %v544 = vpop.f32.mrf.mxu0
        %v545 = vpop.f32.mrf.mxu0
        %v546 = vadd.f32 0.0, %v545
        %v547 = vpop.f32.mrf.mxu0
        %548 = vdwg.mxu0
        %549 = vmatprep.subr.bf16.mxu0 0
        %550 = vmatpush1.bf16.msra.mxu0 %v467
        %551 = vmatprep.subr.bf16.mxu0 0
        %552 = vmatpush1.bf16.msra.mxu0 %v466
        %553 = vmatprep.subr.bf16.mxu0 0
        %554 = vmatpush1.bf16.msra.mxu0 %v465
        %555 = vmatprep.subr.bf16.mxu0 0
        %556 = vmatpush1.bf16.msra.mxu0 %v464
        %557 = vmatprep.subr.bf16.mxu0 0
        %558 = vmatpush1.bf16.msra.mxu0 %v463
        %559 = vmatprep.subr.bf16.mxu0 0
        %560 = vmatpush1.bf16.msra.mxu0 %v462
        %561 = vmatprep.subr.bf16.mxu0 0
        %562 = vmatpush1.bf16.msra.mxu0 %v461
        %563 = vmatprep.subr.bf16.mxu0 0
        %564 = vmatpush1.bf16.msra.mxu0 %v460
        %565 = vmatprep.subr.bf16.mxu0 0
        %566 = vmatpush2.bf16.msra.mxu0 %v475
        %567 = vmatprep.subr.bf16.mxu0 0
        %568 = vmatpush2.bf16.msra.mxu0 %v474
        %569 = vmatprep.subr.bf16.mxu0 0
        %570 = vmatpush2.bf16.msra.mxu0 %v473
        %571 = vmatprep.subr.bf16.mxu0 0
        %572 = vmatpush2.bf16.msra.mxu0 %v472
        %573 = vmatprep.subr.bf16.mxu0 0
        %574 = vmatpush2.bf16.msra.mxu0 %v471
        %575 = vmatprep.subr.bf16.mxu0 0
        %576 = vmatpush2.bf16.msra.mxu0 %v470
        %577 = vmatprep.subr.bf16.mxu0 0
        %578 = vmatpush2.bf16.msra.mxu0 %v469
        %579 = vmatprep.subr.bf16.mxu0 0
        %580 = vmatpush2.bf16.msra.mxu0 %v468
        %581 = vmatprep.mubr.bf16.mxu0 %v311
        %582 = vmatmul.mubr.bf16.gmra.mxu0 %v310
        %v583 = vpop.f32.mrf.mxu0
        %v584 = vadd.f32 %v543, %v583
        %v585 = vpop.f32.mrf.mxu0
        %v586 = vpop.f32.mrf.mxu0
        %v587 = vadd.f32 %v546, %v586
        %v588 = vpop.f32.mrf.mxu0
        %589 = vdwg.mxu0
        %v590 = vadd.f32 %v226, %v584
        %v591 = vadd.f32 %v227, %v587
        %592 = vst [vmem:[#allocation2] sm:$0xff] %v590
        %593 = vst [vmem:[#allocation2 + $0x8] sm:$0xff] %v591
        %p594 = scmp.eq.s32.totalorder %s21, 1
        // Predicated region
        $region45: #{tpu_custom_call.1} parent=31 // pred_check
          %p595 = pneg %p594
        $region46: #{tpu_custom_call.1} parent=31 // pred_check_branch
          %597 = sbr.rel (%p595) target = $region48
        $region47: #{tpu_custom_call.1} parent=31 // pred_region
          %v598 = vld [vmem:[#allocation2] sm:$0xff]
          %v599 = vld [vmem:[#allocation2 + $0x8] sm:$0xff]
          %v600 = vld [vmem:[%s2] sm:$0x1]
          %v602 = vlaneseq
          %v603 = vshrl.u32 %v602, 7
          %v604 = vsub.s32 0, %v603
          %v605 = vrot.slane %v600, %v604
          %v607 = vadd.f32 %v598, %v605
          %v608 = vadd.f32 %v599, %v605
          %v609 = vmul.f32 %v607, %v607
          %v610 = vmul.f32 %v608, %v608
          %611 = vadd.xlane.f32.xlu0 %v609
          %v612 = vpop.xlane.xlu0 %611
          %613 = vadd.xlane.f32.xlu0 %v610
          %v614 = vpop.xlane.xlu0 %613
          %v615 = vmax.f32 %v612, 1e-24
          %v616 = vmax.f32 %v614, 1e-24
          %v617 = vrsqrt.pop %v615
          %v618 = vrsqrt.pop %v616
          %v619 = vmul.f32 %v607, %v617
          %v620 = vmul.f32 %v608, %v618
          %v621 = vpack.c.bf16 %v620, %v619
          %v623 = vunpack.c.l.b16 %v621
          %v624 = vunpack.c.h.b16 %v621
          %v625 = vpack.c.b16 %v623, %v623
          %v626 = vpack.c.b16 %v624, %v624
          %629 = vst [vmem:[#allocation8] sm:$0xf] %v625
          %630 = vst [vmem:[#allocation8 + $0x4] sm:$0xf] %v626
        $region48: #{tpu_custom_call.1} parent=31 // pred_fallthru
          _
        // Predicated region
        $region49: #{tpu_custom_call.1} parent=31 // pred_check
          %p631 = pneg %p107
        $region50: #{tpu_custom_call.1} parent=31 // pred_check_branch
          %633 = sbr.rel (%p631) target = $region52
        $region51: #{tpu_custom_call.1} parent=31 // pred_region
          %s635 = ssub.s32 128, 128
          %636 = vsyncadd [#allocation5], %s635
          %s637 = sshll.u32 [#allocation8], 4
          %s638 = int_to_ptr.vmem [resolvable:$true] %s637
          %643 = dma.vmem_to_hbm [thread:$0]  %s638, 128, %s3, [#allocation5], 64, 64, 4
        $region52: #{tpu_custom_call.1} parent=31 // pred_fallthru
          _
        // Predicated region
        $region53: #{tpu_custom_call.1} parent=31 // pred_check
          %p644 = pneg %p107
        $region54: #{tpu_custom_call.1} parent=31 // pred_check_branch
          %646 = sbr.rel (%p644) target = $region56
        $region55: #{tpu_custom_call.1} parent=31 // pred_region
          %647 = dma.done [#allocation5], 128
        $region56: #{tpu_custom_call.1} parent=31 // pred_fallthru
          _
      $region32: #{tpu_custom_call.1} parent=5 // pred_fallthru
        _
      %p648 = scmp.le.s32.totalorder 2, %s16
      // Predicated region
      $region57: #{tpu_custom_call.1} parent=5 // pred_check
        %p649 = pneg %p648
      $region58: #{tpu_custom_call.1} parent=5 // pred_check_branch
        %651 = sbr.rel (%p649) target = $region60
      $region59: #{tpu_custom_call.1} parent=5 // pred_region
        %s652 = ssub.s32 %s16, 2
      $region60: #{tpu_custom_call.1} parent=5 // pred_fallthru
        _
    $region6: #{tpu_custom_call.1} parent=1 // loop_footer
      %s20 = sadd.s32 1, %s16
    $region7: #{tpu_custom_call.1} parent=1 // loop_footer_branch
      %15 = sbr.rel target = $region3
    $region8: #{tpu_custom_call.1} parent=1 // loop_exit
      _
    %653 = vsyncpa [#allocation4], 1
    %s654 = scalar_lea.sflag [#allocation4], 1
    %655 = vsyncpa %s654, 1
    %656 = vsyncpa [#allocation7], 1
    %s657 = scalar_lea.sflag [#allocation7], 1
    %658 = vsyncpa %s657, 1
    %659 = vsyncpa [#allocation5], 1
    %s660 = scalar_lea.sflag [#allocation5], 1
    %661 = vsyncpa %s660, 1

</llo_original>
